<compile_context>
chip_gen: v7x
topology: tpu7x:2x2x1
jax: 0.10.0
libtpu: 0.0.40
codegen_flags: <defaults>
</compile_context>

<pallas_src>
import functools

import jax
import jax.numpy as jnp
from jax.experimental import pallas as pl
from jax.experimental.pallas import tpu as pltpu


def _point_depthwise_kernel(x_ref, wpw_ref, b1_ref, wdw_ref, b2_ref, hw_ref,
                            out_ref, *, H, W, Cout, k, pad, Nb, Lp):
    """One grid step: Nb images, each (Cin, Lp) lane-dense."""
    wpw = wpw_ref[...]                       # (Cout, Cin), BN1 scale folded
    b1 = b1_ref[...]                         # (Cout, 1)
    wdw = wdw_ref[...]                       # (Cout, k*k), BN2 scale folded
    h_row = hw_ref[0:1, :]                   # (1, Lp) int32: p // W
    w_row = hw_ref[1:2, :]                   # (1, Lp) int32: p %  W

    # ---- hoisted per-tap prep (once per grid step, reused for Nb images) ----
    # Fold the zero-padding boundary mask into the depthwise weight column so
    # the per-image tap update is a single FMA; positions whose source pixel
    # falls outside the image get weight 0 (== zero padding of the BN1 output).
    # TODO(synk): for large Cout switch back to a per-tap select to bound vreg
    #             pressure of the 9 precomputed (Cout, Lp) weight slabs.
    taps = []                                # (flat lane offset, (Cout, Lp) weight)
    for dh in range(k):
        for dw in range(k):
            t = dh * k + dw
            oh, ow = dh - pad, dw - pad
            off = oh * W + ow
            col = wdw[:, t:t + 1]            # (Cout, 1) column, hoisted slice
            conds = []
            if oh < 0:
                conds.append(h_row >= -oh)
            elif oh > 0:
                conds.append(h_row < H - oh)
            if ow < 0:
                conds.append(w_row >= -ow)
            elif ow > 0:
                conds.append(w_row < W - ow)
            if conds:
                m = conds[0]
                for c in conds[1:]:
                    m = jnp.logical_and(m, c)
                w_t = jnp.where(m, col, 0.0)                   # (Cout, Lp)
            else:                                              # center tap
                w_t = jnp.broadcast_to(col, (Cout, Lp))
            taps.append((off, w_t))
    b2_full = jnp.broadcast_to(b2_ref[...], (Cout, Lp))        # BN2 bias

    # ---- per image: pointwise matmul -> depthwise rolls -> ELU --------------
    for n in range(Nb):
        x = x_ref[n]                                           # (Cin, Lp)
        # pointwise 1x1 conv (MXU, BN1 scale folded) + BN1 bias
        y = jnp.dot(wpw, x, preferred_element_type=jnp.float32) + b1   # (Cout, Lp)

        # depthwise k x k conv, stride 1, zero padding, via XLU lane rolls.
        # tap (dh, dw) needs y at flat offset off = (dh-pad)*W + (dw-pad);
        # a roll by (-off) mod Lp delivers it, and the mask (folded into w_t)
        # zeroes positions whose source falls outside the image.
        acc = b2_full
        for off, w_t in taps:
            src = y if off == 0 else pltpu.roll(y, shift=(-off) % Lp, axis=1)
            acc = acc + src * w_t

        # ELU (alpha=1); exp(z)-1 matches the module's ELU formula.
        z = acc
        out_ref[n] = jnp.where(z > 0, z, jnp.exp(z) - 1.0).astype(out_ref.dtype)


def _images_per_step(N, Lp, target_lanes=512):
    """Images per grid step: amortize per-step overhead, keep N % Nb == 0."""
    nb = max(1, min(N, target_lanes // Lp))
    while N % nb:
        nb -= 1
    return nb


def point_depthwise_conv(x_nchw, wpw, s1, b1, wdw, s2, b2, *, kernel_size,
                         use_bf16_matmul=False):
    """x_nchw: (N, Cin, H, W) f32.  wpw: (Cin, Cout).  wdw: (k, k, Cout).
    s1/b1/s2/b2: (Cout,) folded BatchNorm scale/bias.  Returns (N, Cout, H, W)."""
    N, Cin, H, W = x_nchw.shape
    Cout = wpw.shape[1]
    k = kernel_size
    pad = k // 2
    L = H * W
    Lp = ((L + 127) // 128) * 128            # lane dim multiple of 128 (unmasked vst)

    # Fold BN scales into the conv weights (inference mode).
    wpw_f = (wpw * s1[None, :]).T.astype(jnp.float32)                 # (Cout, Cin)
    b1_c = b1.astype(jnp.float32)[:, None]                            # (Cout, 1)
    wdw_f = (wdw * s2[None, None, :]).reshape(k * k, Cout).T
    wdw_f = wdw_f.astype(jnp.float32)                                 # (Cout, k*k)
    b2_c = b2.astype(jnp.float32)[:, None]                            # (Cout, 1)

    # Two tiny int32 coordinate rows; the kernel builds the boundary masks
    # from these (replaces the old (k*k, L) f32 mask input).
    pos = jnp.arange(Lp, dtype=jnp.int32)
    hw = jnp.stack([pos // W, pos % W], axis=0)                       # (2, Lp)

    x_flat = x_nchw.reshape(N, Cin, L)                                # free reshape
    if Lp != L:
        x_flat = jnp.pad(x_flat, ((0, 0), (0, 0), (0, Lp - L)))

    if use_bf16_matmul:
        # bf16 is native on the v6e/v7x MXU and halves x's HBM/VMEM footprint;
        # accumulation stays f32 via preferred_element_type.
        x_flat = x_flat.astype(jnp.bfloat16)
        wpw_f = wpw_f.astype(jnp.bfloat16)

    Nb = _images_per_step(N, Lp)
    # TODO(synk): add an H-tile (halo) parallel grid axis for v7x so large
    #             images / channel counts fit 64 MiB VMEM and both TCs get work.

    kernel = functools.partial(_point_depthwise_kernel, H=H, W=W, Cout=Cout,
                               k=k, pad=pad, Nb=Nb, Lp=Lp)

    cost = pl.CostEstimate(
        flops=2 * N * Lp * Cin * Cout + 2 * N * Lp * Cout * k * k,
        transcendentals=N * Lp * Cout,
        bytes_accessed=(x_flat.dtype.itemsize * N * Cin * Lp
                        + 4 * N * Cout * Lp
                        + wpw_f.dtype.itemsize * Cin * Cout
                        + 4 * Cout * (k * k + 2)
                        + 4 * 2 * Lp),
    )

    # TODO(synk): mark grid-invariant operands (wpw, b1, wdw, b2, hw) with
    #             pipeline_mode=pl.Buffered(1) to drop their double buffering.
    out_flat = pl.pallas_call(
        kernel,
        out_shape=jax.ShapeDtypeStruct((N, Cout, Lp), jnp.float32),
        grid=(N // Nb,),
        in_specs=[
            pl.BlockSpec((Nb, Cin, Lp), lambda i: (i, 0, 0)),    # x (lane-dense L)
            pl.BlockSpec((Cout, Cin), lambda i: (0, 0)),         # folded pointwise W
            pl.BlockSpec((Cout, 1), lambda i: (0, 0)),           # BN1 bias
            pl.BlockSpec((Cout, k * k), lambda i: (0, 0)),       # folded depthwise W
            pl.BlockSpec((Cout, 1), lambda i: (0, 0)),           # BN2 bias
            pl.BlockSpec((2, Lp), lambda i: (0, 0)),             # (h, w) lane coords
        ],
        out_specs=pl.BlockSpec((Nb, Cout, Lp), lambda i: (i, 0, 0)),
        compiler_params=pltpu.CompilerParams(
            dimension_semantics=("parallel",)),
        cost_estimate=cost,
    )(x_flat, wpw_f, b1_c, wdw_f, b2_c, hw)

    return out_flat[..., :L].reshape(N, Cout, H, W)


def _reference(x_nchw, wpw, s1, b1, wdw, s2, b2, *, kernel_size):
    """Pure-JAX reference (same folded-BN inference semantics)."""
    k = kernel_size
    pad = k // 2
    x = jnp.transpose(x_nchw, (0, 2, 3, 1))
    y = jnp.einsum('nhwc,cd->nhwd', x, wpw)
    y = y * s1 + b1
    w = wdw.reshape(k, k, 1, -1)
    z = jax.lax.conv_general_dilated(
        y, w, window_strides=(1, 1), padding=[(pad, pad), (pad, pad)],
        dimension_numbers=('NHWC', 'HWIO', 'NHWC'),
        feature_group_count=y.shape[-1])
    z = z * s2 + b2
    o = jnp.where(z > 0, z, jnp.exp(z) - 1.0)
    return jnp.transpose(o, (0, 3, 1, 2))


def _fold_bn(gamma, beta, running_mean, running_var, eps=1e-5):
    scale = gamma / jnp.sqrt(running_var + eps)
    bias = beta - running_mean * scale
    return scale, bias                                   # (Cout,) each


if __name__ == "__main__":
    # Small shapes consistent with the module: NCHW input.
    N, Cin, H, W = 2, 4, 16, 16
    Cout, K = 8, 3

    key = jax.random.PRNGKey(0)
    keys = jax.random.split(key, 10)

    x = jax.random.normal(keys[0], (N, Cin, H, W), jnp.float32)

    # Parameters (deterministic init). PyTorch pointwise weight is
    # (Cout, Cin, 1, 1); we store it as (Cin, Cout). Depthwise weight is
    # (Cout, 1, K, K); we store it as (K, K, Cout).
    wpw = 0.3 * jax.random.normal(keys[1], (Cin, Cout), jnp.float32)
    wdw = 0.3 * jax.random.normal(keys[2], (K, K, Cout), jnp.float32)

    g1 = 1.0 + 0.1 * jax.random.normal(keys[3], (Cout,), jnp.float32)
    be1 = 0.1 * jax.random.normal(keys[4], (Cout,), jnp.float32)
    rm1 = 0.1 * jax.random.normal(keys[5], (Cout,), jnp.float32)
    rv1 = 1.0 + 0.1 * jnp.abs(jax.random.normal(keys[6], (Cout,), jnp.float32))

    g2 = 1.0 + 0.1 * jax.random.normal(keys[7], (Cout,), jnp.float32)
    be2 = 0.1 * jax.random.normal(keys[8], (Cout,), jnp.float32)
    rm2 = 0.1 * jax.random.normal(keys[9], (Cout,), jnp.float32)
    rv2 = 1.0 + 0.05 * jnp.ones((Cout,), jnp.float32)

    s1, b1 = _fold_bn(g1, be1, rm1, rv1)
    s2, b2 = _fold_bn(g2, be2, rm2, rv2)

    out = point_depthwise_conv(x, wpw, s1, b1, wdw, s2, b2, kernel_size=K)
    out = jax.block_until_ready(out)

    ref = _reference(x, wpw, s1, b1, wdw, s2, b2, kernel_size=K)
    assert out.shape == (N, Cout, H, W)
    assert jnp.allclose(out, ref, atol=1e-4, rtol=1e-4), \
        f"max abs err {jnp.max(jnp.abs(out - ref))}"

    print("KERNEL_OK")
</pallas_src>

<mosaic_0001>
module attributes {stable_mosaic.version = 11 : i64} {
  func.func @_point_depthwise_kernel(%arg0: i32, %arg1: memref<2x4x256xf32, #tpu.memory_space<vmem>>, %arg2: memref<8x4xf32, #tpu.memory_space<vmem>>, %arg3: memref<8x1xf32, #tpu.memory_space<vmem>>, %arg4: memref<8x9xf32, #tpu.memory_space<vmem>>, %arg5: memref<8x1xf32, #tpu.memory_space<vmem>>, %arg6: memref<2x256xi32, #tpu.memory_space<vmem>>, %arg7: memref<2x8x256xf32, #tpu.memory_space<vmem>>) attributes {dimension_semantics = [#tpu.dimension_semantics<parallel>], iteration_bounds = array<i64: 1>, scalar_prefetch = 0 : i64, scratch_operands = 0 : i64, tpu.core_type = #tpu.core_type<tc>, window_params = [{transform_indices = @transform_0, window_bounds = array<i64: 2, 4, 256>}, {pipeline_mode = #tpu.pipeline_mode<synchronous>, transform_indices = @transform_1, window_bounds = array<i64: 8, 4>}, {pipeline_mode = #tpu.pipeline_mode<synchronous>, transform_indices = @transform_2, window_bounds = array<i64: 8, 1>}, {pipeline_mode = #tpu.pipeline_mode<synchronous>, transform_indices = @transform_3, window_bounds = array<i64: 8, 9>}, {pipeline_mode = #tpu.pipeline_mode<synchronous>, transform_indices = @transform_4, window_bounds = array<i64: 8, 1>}, {pipeline_mode = #tpu.pipeline_mode<synchronous>, transform_indices = @transform_5, window_bounds = array<i64: 2, 256>}, {transform_indices = @transform_6, window_bounds = array<i64: 2, 8, 256>}]} {
    %c0 = arith.constant 0 : index
    %c0_0 = arith.constant 0 : index
    %0 = vector.load %arg2[%c0, %c0_0] : memref<8x4xf32, #tpu.memory_space<vmem>>, vector<8x4xf32>
    %c0_1 = arith.constant 0 : index
    %c0_2 = arith.constant 0 : index
    %1 = vector.load %arg3[%c0_1, %c0_2] : memref<8x1xf32, #tpu.memory_space<vmem>>, vector<8x1xf32>
    %c0_3 = arith.constant 0 : index
    %c0_4 = arith.constant 0 : index
    %2 = vector.load %arg4[%c0_3, %c0_4] : memref<8x9xf32, #tpu.memory_space<vmem>>, vector<8x9xf32>
    %c0_5 = arith.constant 0 : index
    %c0_6 = arith.constant 0 : index
    %3 = vector.load %arg6[%c0_5, %c0_6] : memref<2x256xi32, #tpu.memory_space<vmem>>, vector<1x256xi32>
    %c1 = arith.constant 1 : index
    %c0_7 = arith.constant 0 : index
    %4 = vector.load %arg6[%c1, %c0_7] : memref<2x256xi32, #tpu.memory_space<vmem>>, vector<1x256xi32>
    %5 = vector.extract_strided_slice %2 {offsets = [0, 0], sizes = [8, 1], strides = [1, 1]} : vector<8x9xf32> to vector<8x1xf32>
    %c1_i32 = arith.constant 1 : i32
    %6 = vector.broadcast %c1_i32 : i32 to vector<1x256xi32>
    %7 = arith.cmpi sge, %3, %6 : vector<1x256xi32>
    %c1_i32_8 = arith.constant 1 : i32
    %8 = vector.broadcast %c1_i32_8 : i32 to vector<1x256xi32>
    %9 = arith.cmpi sge, %4, %8 : vector<1x256xi32>
    %10 = arith.andi %7, %9 : vector<1x256xi1>
    %cst = arith.constant 0.000000e+00 : f32
    %11 = vector.shape_cast %10 : vector<1x256xi1> to vector<1x256xi1>
    %12 = vector.broadcast %11 : vector<1x256xi1> to vector<8x256xi1>
    %13 = vector.shape_cast %5 : vector<8x1xf32> to vector<8x1xf32>
    %14 = vector.broadcast %13 : vector<8x1xf32> to vector<8x256xf32>
    %15 = vector.broadcast %cst : f32 to vector<8x256xf32>
    %16 = arith.select %12, %14, %15 : vector<8x256xi1>, vector<8x256xf32>
    %17 = vector.extract_strided_slice %2 {offsets = [0, 1], sizes = [8, 1], strides = [1, 1]} : vector<8x9xf32> to vector<8x1xf32>
    %c1_i32_9 = arith.constant 1 : i32
    %18 = vector.broadcast %c1_i32_9 : i32 to vector<1x256xi32>
    %19 = arith.cmpi sge, %3, %18 : vector<1x256xi32>
    %cst_10 = arith.constant 0.000000e+00 : f32
    %20 = vector.shape_cast %19 : vector<1x256xi1> to vector<1x256xi1>
    %21 = vector.broadcast %20 : vector<1x256xi1> to vector<8x256xi1>
    %22 = vector.shape_cast %17 : vector<8x1xf32> to vector<8x1xf32>
    %23 = vector.broadcast %22 : vector<8x1xf32> to vector<8x256xf32>
    %24 = vector.broadcast %cst_10 : f32 to vector<8x256xf32>
    %25 = arith.select %21, %23, %24 : vector<8x256xi1>, vector<8x256xf32>
    %26 = vector.extract_strided_slice %2 {offsets = [0, 2], sizes = [8, 1], strides = [1, 1]} : vector<8x9xf32> to vector<8x1xf32>
    %c1_i32_11 = arith.constant 1 : i32
    %27 = vector.broadcast %c1_i32_11 : i32 to vector<1x256xi32>
    %28 = arith.cmpi sge, %3, %27 : vector<1x256xi32>
    %c15_i32 = arith.constant 15 : i32
    %29 = vector.broadcast %c15_i32 : i32 to vector<1x256xi32>
    %30 = arith.cmpi slt, %4, %29 : vector<1x256xi32>
    %31 = arith.andi %28, %30 : vector<1x256xi1>
    %cst_12 = arith.constant 0.000000e+00 : f32
    %32 = vector.shape_cast %31 : vector<1x256xi1> to vector<1x256xi1>
    %33 = vector.broadcast %32 : vector<1x256xi1> to vector<8x256xi1>
    %34 = vector.shape_cast %26 : vector<8x1xf32> to vector<8x1xf32>
    %35 = vector.broadcast %34 : vector<8x1xf32> to vector<8x256xf32>
    %36 = vector.broadcast %cst_12 : f32 to vector<8x256xf32>
    %37 = arith.select %33, %35, %36 : vector<8x256xi1>, vector<8x256xf32>
    %38 = vector.extract_strided_slice %2 {offsets = [0, 3], sizes = [8, 1], strides = [1, 1]} : vector<8x9xf32> to vector<8x1xf32>
    %c1_i32_13 = arith.constant 1 : i32
    %39 = vector.broadcast %c1_i32_13 : i32 to vector<1x256xi32>
    %40 = arith.cmpi sge, %4, %39 : vector<1x256xi32>
    %cst_14 = arith.constant 0.000000e+00 : f32
    %41 = vector.shape_cast %40 : vector<1x256xi1> to vector<1x256xi1>
    %42 = vector.broadcast %41 : vector<1x256xi1> to vector<8x256xi1>
    %43 = vector.shape_cast %38 : vector<8x1xf32> to vector<8x1xf32>
    %44 = vector.broadcast %43 : vector<8x1xf32> to vector<8x256xf32>
    %45 = vector.broadcast %cst_14 : f32 to vector<8x256xf32>
    %46 = arith.select %42, %44, %45 : vector<8x256xi1>, vector<8x256xf32>
    %47 = vector.extract_strided_slice %2 {offsets = [0, 4], sizes = [8, 1], strides = [1, 1]} : vector<8x9xf32> to vector<8x1xf32>
    %48 = vector.shape_cast %47 : vector<8x1xf32> to vector<8x1xf32>
    %49 = vector.broadcast %48 : vector<8x1xf32> to vector<8x256xf32>
    %50 = vector.extract_strided_slice %2 {offsets = [0, 5], sizes = [8, 1], strides = [1, 1]} : vector<8x9xf32> to vector<8x1xf32>
    %c15_i32_15 = arith.constant 15 : i32
    %51 = vector.broadcast %c15_i32_15 : i32 to vector<1x256xi32>
    %52 = arith.cmpi slt, %4, %51 : vector<1x256xi32>
    %cst_16 = arith.constant 0.000000e+00 : f32
    %53 = vector.shape_cast %52 : vector<1x256xi1> to vector<1x256xi1>
    %54 = vector.broadcast %53 : vector<1x256xi1> to vector<8x256xi1>
    %55 = vector.shape_cast %50 : vector<8x1xf32> to vector<8x1xf32>
    %56 = vector.broadcast %55 : vector<8x1xf32> to vector<8x256xf32>
    %57 = vector.broadcast %cst_16 : f32 to vector<8x256xf32>
    %58 = arith.select %54, %56, %57 : vector<8x256xi1>, vector<8x256xf32>
    %59 = vector.extract_strided_slice %2 {offsets = [0, 6], sizes = [8, 1], strides = [1, 1]} : vector<8x9xf32> to vector<8x1xf32>
    %c15_i32_17 = arith.constant 15 : i32
    %60 = vector.broadcast %c15_i32_17 : i32 to vector<1x256xi32>
    %61 = arith.cmpi slt, %3, %60 : vector<1x256xi32>
    %c1_i32_18 = arith.constant 1 : i32
    %62 = vector.broadcast %c1_i32_18 : i32 to vector<1x256xi32>
    %63 = arith.cmpi sge, %4, %62 : vector<1x256xi32>
    %64 = arith.andi %61, %63 : vector<1x256xi1>
    %cst_19 = arith.constant 0.000000e+00 : f32
    %65 = vector.shape_cast %64 : vector<1x256xi1> to vector<1x256xi1>
    %66 = vector.broadcast %65 : vector<1x256xi1> to vector<8x256xi1>
    %67 = vector.shape_cast %59 : vector<8x1xf32> to vector<8x1xf32>
    %68 = vector.broadcast %67 : vector<8x1xf32> to vector<8x256xf32>
    %69 = vector.broadcast %cst_19 : f32 to vector<8x256xf32>
    %70 = arith.select %66, %68, %69 : vector<8x256xi1>, vector<8x256xf32>
    %71 = vector.extract_strided_slice %2 {offsets = [0, 7], sizes = [8, 1], strides = [1, 1]} : vector<8x9xf32> to vector<8x1xf32>
    %c15_i32_20 = arith.constant 15 : i32
    %72 = vector.broadcast %c15_i32_20 : i32 to vector<1x256xi32>
    %73 = arith.cmpi slt, %3, %72 : vector<1x256xi32>
    %cst_21 = arith.constant 0.000000e+00 : f32
    %74 = vector.shape_cast %73 : vector<1x256xi1> to vector<1x256xi1>
    %75 = vector.broadcast %74 : vector<1x256xi1> to vector<8x256xi1>
    %76 = vector.shape_cast %71 : vector<8x1xf32> to vector<8x1xf32>
    %77 = vector.broadcast %76 : vector<8x1xf32> to vector<8x256xf32>
    %78 = vector.broadcast %cst_21 : f32 to vector<8x256xf32>
    %79 = arith.select %75, %77, %78 : vector<8x256xi1>, vector<8x256xf32>
    %80 = vector.extract_strided_slice %2 {offsets = [0, 8], sizes = [8, 1], strides = [1, 1]} : vector<8x9xf32> to vector<8x1xf32>
    %c15_i32_22 = arith.constant 15 : i32
    %81 = vector.broadcast %c15_i32_22 : i32 to vector<1x256xi32>
    %82 = arith.cmpi slt, %3, %81 : vector<1x256xi32>
    %c15_i32_23 = arith.constant 15 : i32
    %83 = vector.broadcast %c15_i32_23 : i32 to vector<1x256xi32>
    %84 = arith.cmpi slt, %4, %83 : vector<1x256xi32>
    %85 = arith.andi %82, %84 : vector<1x256xi1>
    %cst_24 = arith.constant 0.000000e+00 : f32
    %86 = vector.shape_cast %85 : vector<1x256xi1> to vector<1x256xi1>
    %87 = vector.broadcast %86 : vector<1x256xi1> to vector<8x256xi1>
    %88 = vector.shape_cast %80 : vector<8x1xf32> to vector<8x1xf32>
    %89 = vector.broadcast %88 : vector<8x1xf32> to vector<8x256xf32>
    %90 = vector.broadcast %cst_24 : f32 to vector<8x256xf32>
    %91 = arith.select %87, %89, %90 : vector<8x256xi1>, vector<8x256xf32>
    %c0_25 = arith.constant 0 : index
    %c0_26 = arith.constant 0 : index
    %92 = vector.load %arg5[%c0_25, %c0_26] : memref<8x1xf32, #tpu.memory_space<vmem>>, vector<8x1xf32>
    %93 = vector.shape_cast %92 : vector<8x1xf32> to vector<8x1xf32>
    %94 = vector.broadcast %93 : vector<8x1xf32> to vector<8x256xf32>
    %c0_27 = arith.constant 0 : index
    %c0_28 = arith.constant 0 : index
    %c0_29 = arith.constant 0 : index
    %95 = vector.load %arg1[%c0_27, %c0_28, %c0_29] : memref<2x4x256xf32, #tpu.memory_space<vmem>>, vector<1x4x256xf32>
    %96 = vector.shape_cast %95 : vector<1x4x256xf32> to vector<4x256xf32>
    %cst_30 = arith.constant dense<0.000000e+00> : vector<8x256xf32>
    %97 = tpu.matmul %0, %96, %cst_30 {dimension_numbers = #tpu.dot_dimension_numbers<[1], [0], [0], [1], [0, 0, 1, 1], [], []>} : vector<8x4xf32>, vector<4x256xf32>, vector<8x256xf32> -> vector<8x256xf32>
    %98 = vector.broadcast %1 : vector<8x1xf32> to vector<8x256xf32>
    %99 = arith.addf %97, %98 : vector<8x256xf32>
    %c17_i32 = arith.constant 17 : i32
    %100 = tpu.dynamic_rotate %99 by %c17_i32 dim 1 : vector<8x256xf32>, i32 -> vector<8x256xf32>
    %101 = arith.mulf %100, %16 : vector<8x256xf32>
    %102 = arith.addf %94, %101 : vector<8x256xf32>
    %c16_i32 = arith.constant 16 : i32
    %103 = tpu.dynamic_rotate %99 by %c16_i32 dim 1 : vector<8x256xf32>, i32 -> vector<8x256xf32>
    %104 = arith.mulf %103, %25 : vector<8x256xf32>
    %105 = arith.addf %102, %104 : vector<8x256xf32>
    %c15_i32_31 = arith.constant 15 : i32
    %106 = tpu.dynamic_rotate %99 by %c15_i32_31 dim 1 : vector<8x256xf32>, i32 -> vector<8x256xf32>
    %107 = arith.mulf %106, %37 : vector<8x256xf32>
    %108 = arith.addf %105, %107 : vector<8x256xf32>
    %c1_i32_32 = arith.constant 1 : i32
    %109 = tpu.dynamic_rotate %99 by %c1_i32_32 dim 1 : vector<8x256xf32>, i32 -> vector<8x256xf32>
    %110 = arith.mulf %109, %46 : vector<8x256xf32>
    %111 = arith.addf %108, %110 : vector<8x256xf32>
    %112 = arith.mulf %99, %49 : vector<8x256xf32>
    %113 = arith.addf %111, %112 : vector<8x256xf32>
    %c255_i32 = arith.constant 255 : i32
    %114 = tpu.dynamic_rotate %99 by %c255_i32 dim 1 : vector<8x256xf32>, i32 -> vector<8x256xf32>
    %115 = arith.mulf %114, %58 : vector<8x256xf32>
    %116 = arith.addf %113, %115 : vector<8x256xf32>
    %c241_i32 = arith.constant 241 : i32
    %117 = tpu.dynamic_rotate %99 by %c241_i32 dim 1 : vector<8x256xf32>, i32 -> vector<8x256xf32>
    %118 = arith.mulf %117, %70 : vector<8x256xf32>
    %119 = arith.addf %116, %118 : vector<8x256xf32>
    %c240_i32 = arith.constant 240 : i32
    %120 = tpu.dynamic_rotate %99 by %c240_i32 dim 1 : vector<8x256xf32>, i32 -> vector<8x256xf32>
    %121 = arith.mulf %120, %79 : vector<8x256xf32>
    %122 = arith.addf %119, %121 : vector<8x256xf32>
    %c239_i32 = arith.constant 239 : i32
    %123 = tpu.dynamic_rotate %99 by %c239_i32 dim 1 : vector<8x256xf32>, i32 -> vector<8x256xf32>
    %124 = arith.mulf %123, %91 : vector<8x256xf32>
    %125 = arith.addf %122, %124 : vector<8x256xf32>
    %cst_33 = arith.constant 0.000000e+00 : f32
    %126 = vector.broadcast %cst_33 : f32 to vector<8x256xf32>
    %127 = arith.cmpf ogt, %125, %126 : vector<8x256xf32>
    %128 = math.exp %125 : vector<8x256xf32>
    %cst_34 = arith.constant 1.000000e+00 : f32
    %129 = vector.broadcast %cst_34 : f32 to vector<8x256xf32>
    %130 = arith.subf %128, %129 : vector<8x256xf32>
    %131 = arith.select %127, %125, %130 : vector<8x256xi1>, vector<8x256xf32>
    %c0_35 = arith.constant 0 : index
    %c0_36 = arith.constant 0 : index
    %c0_37 = arith.constant 0 : index
    %132 = vector.load %arg7[%c0_35, %c0_36, %c0_37] : memref<2x8x256xf32, #tpu.memory_space<vmem>>, vector<1x8x256xf32>
    %133 = vector.shape_cast %132 : vector<1x8x256xf32> to vector<8x256xf32>
    %134 = vector.shape_cast %131 : vector<8x256xf32> to vector<1x8x256xf32>
    tpu.vector_store %arg7[%c0_35, %c0_36, %c0_37], %134 {strides = array<i32>} : memref<2x8x256xf32, #tpu.memory_space<vmem>>, vector<1x8x256xf32>,
    %c1_38 = arith.constant 1 : index
    %c0_39 = arith.constant 0 : index
    %c0_40 = arith.constant 0 : index
    %135 = vector.load %arg1[%c1_38, %c0_39, %c0_40] : memref<2x4x256xf32, #tpu.memory_space<vmem>>, vector<1x4x256xf32>
    %136 = vector.shape_cast %135 : vector<1x4x256xf32> to vector<4x256xf32>
    %cst_41 = arith.constant dense<0.000000e+00> : vector<8x256xf32>
    %137 = tpu.matmul %0, %136, %cst_41 {dimension_numbers = #tpu.dot_dimension_numbers<[1], [0], [0], [1], [0, 0, 1, 1], [], []>} : vector<8x4xf32>, vector<4x256xf32>, vector<8x256xf32> -> vector<8x256xf32>
    %138 = vector.broadcast %1 : vector<8x1xf32> to vector<8x256xf32>
    %139 = arith.addf %137, %138 : vector<8x256xf32>
    %c17_i32_42 = arith.constant 17 : i32
    %140 = tpu.dynamic_rotate %139 by %c17_i32_42 dim 1 : vector<8x256xf32>, i32 -> vector<8x256xf32>
    %141 = arith.mulf %140, %16 : vector<8x256xf32>
    %142 = arith.addf %94, %141 : vector<8x256xf32>
    %c16_i32_43 = arith.constant 16 : i32
    %143 = tpu.dynamic_rotate %139 by %c16_i32_43 dim 1 : vector<8x256xf32>, i32 -> vector<8x256xf32>
    %144 = arith.mulf %143, %25 : vector<8x256xf32>
    %145 = arith.addf %142, %144 : vector<8x256xf32>
    %c15_i32_44 = arith.constant 15 : i32
    %146 = tpu.dynamic_rotate %139 by %c15_i32_44 dim 1 : vector<8x256xf32>, i32 -> vector<8x256xf32>
    %147 = arith.mulf %146, %37 : vector<8x256xf32>
    %148 = arith.addf %145, %147 : vector<8x256xf32>
    %c1_i32_45 = arith.constant 1 : i32
    %149 = tpu.dynamic_rotate %139 by %c1_i32_45 dim 1 : vector<8x256xf32>, i32 -> vector<8x256xf32>
    %150 = arith.mulf %149, %46 : vector<8x256xf32>
    %151 = arith.addf %148, %150 : vector<8x256xf32>
    %152 = arith.mulf %139, %49 : vector<8x256xf32>
    %153 = arith.addf %151, %152 : vector<8x256xf32>
    %c255_i32_46 = arith.constant 255 : i32
    %154 = tpu.dynamic_rotate %139 by %c255_i32_46 dim 1 : vector<8x256xf32>, i32 -> vector<8x256xf32>
    %155 = arith.mulf %154, %58 : vector<8x256xf32>
    %156 = arith.addf %153, %155 : vector<8x256xf32>
    %c241_i32_47 = arith.constant 241 : i32
    %157 = tpu.dynamic_rotate %139 by %c241_i32_47 dim 1 : vector<8x256xf32>, i32 -> vector<8x256xf32>
    %158 = arith.mulf %157, %70 : vector<8x256xf32>
    %159 = arith.addf %156, %158 : vector<8x256xf32>
    %c240_i32_48 = arith.constant 240 : i32
    %160 = tpu.dynamic_rotate %139 by %c240_i32_48 dim 1 : vector<8x256xf32>, i32 -> vector<8x256xf32>
    %161 = arith.mulf %160, %79 : vector<8x256xf32>
    %162 = arith.addf %159, %161 : vector<8x256xf32>
    %c239_i32_49 = arith.constant 239 : i32
    %163 = tpu.dynamic_rotate %139 by %c239_i32_49 dim 1 : vector<8x256xf32>, i32 -> vector<8x256xf32>
    %164 = arith.mulf %163, %91 : vector<8x256xf32>
    %165 = arith.addf %162, %164 : vector<8x256xf32>
    %cst_50 = arith.constant 0.000000e+00 : f32
    %166 = vector.broadcast %cst_50 : f32 to vector<8x256xf32>
    %167 = arith.cmpf ogt, %165, %166 : vector<8x256xf32>
    %168 = math.exp %165 : vector<8x256xf32>
    %cst_51 = arith.constant 1.000000e+00 : f32
    %169 = vector.broadcast %cst_51 : f32 to vector<8x256xf32>
    %170 = arith.subf %168, %169 : vector<8x256xf32>
    %171 = arith.select %167, %165, %170 : vector<8x256xi1>, vector<8x256xf32>
    %c1_52 = arith.constant 1 : index
    %c0_53 = arith.constant 0 : index
    %c0_54 = arith.constant 0 : index
    %172 = vector.load %arg7[%c1_52, %c0_53, %c0_54] : memref<2x8x256xf32, #tpu.memory_space<vmem>>, vector<1x8x256xf32>
    %173 = vector.shape_cast %172 : vector<1x8x256xf32> to vector<8x256xf32>
    %174 = vector.shape_cast %171 : vector<8x256xf32> to vector<1x8x256xf32>
    tpu.vector_store %arg7[%c1_52, %c0_53, %c0_54], %174 {strides = array<i32>} : memref<2x8x256xf32, #tpu.memory_space<vmem>>, vector<1x8x256xf32>,
    return
  }
  func.func @transform_0(%arg0: i32) -> (i32, i32, i32) {
    %c0_i32 = arith.constant 0 : i32
    %c0_i32_0 = arith.constant 0 : i32
    %c0_i32_1 = arith.constant 0 : i32
    return %arg0, %c0_i32, %c0_i32_0 : i32, i32, i32
  }
  func.func @transform_1(%arg0: i32) -> (i32, i32) {
    %c0_i32 = arith.constant 0 : i32
    %c0_i32_0 = arith.constant 0 : i32
    %c0_i32_1 = arith.constant 0 : i32
    return %c0_i32, %c0_i32_0 : i32, i32
  }
  func.func @transform_2(%arg0: i32) -> (i32, i32) {
    %c0_i32 = arith.constant 0 : i32
    %c0_i32_0 = arith.constant 0 : i32
    %c0_i32_1 = arith.constant 0 : i32
    return %c0_i32, %c0_i32_0 : i32, i32
  }
  func.func @transform_3(%arg0: i32) -> (i32, i32) {
    %c0_i32 = arith.constant 0 : i32
    %c0_i32_0 = arith.constant 0 : i32
    %c0_i32_1 = arith.constant 0 : i32
    return %c0_i32, %c0_i32_0 : i32, i32
  }
  func.func @transform_4(%arg0: i32) -> (i32, i32) {
    %c0_i32 = arith.constant 0 : i32
    %c0_i32_0 = arith.constant 0 : i32
    %c0_i32_1 = arith.constant 0 : i32
    return %c0_i32, %c0_i32_0 : i32, i32
  }
  func.func @transform_5(%arg0: i32) -> (i32, i32) {
    %c0_i32 = arith.constant 0 : i32
    %c0_i32_0 = arith.constant 0 : i32
    %c0_i32_1 = arith.constant 0 : i32
    return %c0_i32, %c0_i32_0 : i32, i32
  }
  func.func @transform_6(%arg0: i32) -> (i32, i32, i32) {
    %c0_i32 = arith.constant 0 : i32
    %c0_i32_0 = arith.constant 0 : i32
    %c0_i32_1 = arith.constant 0 : i32
    return %arg0, %c0_i32, %c0_i32_0 : i32, i32, i32
  }
}

</mosaic_0001>

<llo_original>
// kernel: tpu_custom_call.1
$region0: #{tpu_custom_call.1}
  #allocation0 [shape = 'u32[]', space=smem, size = 0x4, offset = 0x4, fixed_abs, tag = 'smem constant byte address 0x4 - core index']
  #allocation1 [shape = 'u32[144,128]{1,0:T(1,128)}', space=vmem, size = 0x12000, scoped, tag = 'internal scratch']
  %s0 = inlined_call_operand.vmem [shape: f32[2,4,256], index: 0, kind: input, shape index: {}]
  %s1 = inlined_call_operand.vmem [shape: f32[8,4], index: 1, kind: input, shape index: {}]
  %s2 = inlined_call_operand.vmem [shape: f32[8,1], index: 2, kind: input, shape index: {}]
  %s3 = inlined_call_operand.vmem [shape: f32[8,9], index: 3, kind: input, shape index: {}]
  %s4 = inlined_call_operand.vmem [shape: f32[8,1], index: 4, kind: input, shape index: {}]
  %s5 = inlined_call_operand.vmem [shape: s32[2,256], index: 5, kind: input, shape index: {}]
  %s6 = inlined_call_operand.hbm [shape: f32[2,8,256], index: 6, kind: output, shape index: {}]
  %s7 = sld [smem:[#allocation0]]
  $region34: #{tpu_custom_call.1} parent=0
    _
  %s9 = ssub.s32 1, %s7
  %s10 = scalar_select 0, %s9, %s7
  $region1: #{tpu_custom_call.1} parent=0
    #allocation2 [shape = 'u8[16384]{0}', space=vmem, size = 0x4000, scoped, tag = 'output window, operand 0, single buffered']
    #allocation3 [shape = 's32[1]{0}', space=sflag, size = 0x4, scoped, tag = 'scoped memory for tpu_custom_call.1']
    %11 = vsyncpa [#allocation3], 0
    // Predicated region
    $region2: #{tpu_custom_call.1} parent=1 // pred_check
      _
    $region3: #{tpu_custom_call.1} parent=1 // pred_check_branch
      %13 = sbr.rel (0) target = $region5
    $region4: #{tpu_custom_call.1} parent=1 // pred_region
      _
    $region5: #{tpu_custom_call.1} parent=1 // pred_fallthru
      _
    // Predicated region
    $region6: #{tpu_custom_call.1} parent=1 // pred_check
      _
    $region7: #{tpu_custom_call.1} parent=1 // pred_check_branch
      %15 = sbr.rel (0) target = $region9
    $region8: #{tpu_custom_call.1} parent=1 // pred_region
      _
    $region9: #{tpu_custom_call.1} parent=1 // pred_fallthru
      _
    // Predicated region
    $region10: #{tpu_custom_call.1} parent=1 // pred_check
      _
    $region11: #{tpu_custom_call.1} parent=1 // pred_check_branch
      %17 = sbr.rel (0) target = $region13
    $region12: #{tpu_custom_call.1} parent=1 // pred_region
      _
    $region13: #{tpu_custom_call.1} parent=1 // pred_fallthru
      _
    // Predicated region
    $region14: #{tpu_custom_call.1} parent=1 // pred_check
      _
    $region15: #{tpu_custom_call.1} parent=1 // pred_check_branch
      %19 = sbr.rel (0) target = $region17
    $region16: #{tpu_custom_call.1} parent=1 // pred_region
      _
    $region17: #{tpu_custom_call.1} parent=1 // pred_fallthru
      _
    // Predicated region
    $region18: #{tpu_custom_call.1} parent=1 // pred_check
      _
    $region19: #{tpu_custom_call.1} parent=1 // pred_check_branch
      %21 = sbr.rel (0) target = $region21
    $region20: #{tpu_custom_call.1} parent=1 // pred_region
      _
    $region21: #{tpu_custom_call.1} parent=1 // pred_fallthru
      _
    // Predicated region
    $region22: #{tpu_custom_call.1} parent=1 // pred_check
      _
    $region23: #{tpu_custom_call.1} parent=1 // pred_check_branch
      %23 = sbr.rel (0) target = $region25
    $region24: #{tpu_custom_call.1} parent=1 // pred_region
      _
    $region25: #{tpu_custom_call.1} parent=1 // pred_fallthru
      _
    %v24 = vld [vmem:[%s1] sm:$0xff]
    %v25 = vld [vmem:[%s2] sm:$0xff]
    %v26 = vld [vmem:[%s3] sm:$0xff]
    %v27 = vld [vmem:[%s5] ss:$2 sm:$0x3]
    %s28 = scalar_lea.vmem %s5, 1
    %v29 = vld [vmem:[%s28] ss:$2 sm:$0x3]
    %vm30 = vcmp.ge.s32.totalorder %v27, 1
    %vm31 = vcmp.ge.s32.totalorder %v29, 1
    %vm32 = vmand %vm30, %vm31
    %v33 = vsel %vm32, 1, 0
    %v34 = vlaneseq
    %v35 = vshrl.u32 %v34, 7
    %v36 = vsub.s32 0, %v35
    %v37 = vrot.slane %v33, %v36
    %v38 = vlaneseq
    %v39 = vshrl.u32 %v38, 7
    %v40 = vsub.s32 1, %v39
    %v41 = vrot.slane %v33, %v40
    %vm42 = vcmp.eq.s32.totalorder %v37, 1
    %vm43 = vcmp.eq.s32.totalorder %v41, 1
    %45 = vset.pattern.permute.xlu0 0
    %46 = vperm.xlu0 %45, %v26
    %v47 = vpop.permute.xlu0 %46
    %v49 = vsel %vm42, %v47, 0.0
    %v50 = vsel %vm43, %v47, 0.0
    %v51 = vsel %vm30, 1, 0
    %v52 = vlaneseq
    %v53 = vshrl.u32 %v52, 7
    %v54 = vsub.s32 0, %v53
    %v55 = vrot.slane %v51, %v54
    %v56 = vlaneseq
    %v57 = vshrl.u32 %v56, 7
    %v58 = vsub.s32 1, %v57
    %v59 = vrot.slane %v51, %v58
    %vm60 = vcmp.eq.s32.totalorder %v55, 1
    %vm61 = vcmp.eq.s32.totalorder %v59, 1
    %62 = vset.pattern.permute.xlu0 1
    %63 = vperm.xlu0 %62, %v26
    %v64 = vpop.permute.xlu0 %63
    %v66 = vsel %vm60, %v64, 0.0
    %v67 = vsel %vm61, %v64, 0.0
    %vm68 = vcmp.lt.s32.totalorder %v29, 15
    %vm69 = vmand %vm30, %vm68
    %v70 = vsel %vm69, 1, 0
    %v71 = vlaneseq
    %v72 = vshrl.u32 %v71, 7
    %v73 = vsub.s32 0, %v72
    %v74 = vrot.slane %v70, %v73
    %v75 = vlaneseq
    %v76 = vshrl.u32 %v75, 7
    %v77 = vsub.s32 1, %v76
    %v78 = vrot.slane %v70, %v77
    %vm79 = vcmp.eq.s32.totalorder %v74, 1
    %vm80 = vcmp.eq.s32.totalorder %v78, 1
    %81 = vset.pattern.permute.xlu0 2
    %82 = vperm.xlu0 %81, %v26
    %v83 = vpop.permute.xlu0 %82
    %v85 = vsel %vm79, %v83, 0.0
    %v86 = vsel %vm80, %v83, 0.0
    %v87 = vsel %vm31, 1, 0
    %v88 = vlaneseq
    %v89 = vshrl.u32 %v88, 7
    %v90 = vsub.s32 0, %v89
    %v91 = vrot.slane %v87, %v90
    %v92 = vlaneseq
    %v93 = vshrl.u32 %v92, 7
    %v94 = vsub.s32 1, %v93
    %v95 = vrot.slane %v87, %v94
    %vm96 = vcmp.eq.s32.totalorder %v91, 1
    %vm97 = vcmp.eq.s32.totalorder %v95, 1
    %98 = vset.pattern.permute.xlu0 3
    %99 = vperm.xlu0 %98, %v26
    %v100 = vpop.permute.xlu0 %99
    %v102 = vsel %vm96, %v100, 0.0
    %v103 = vsel %vm97, %v100, 0.0
    %104 = vset.pattern.permute.xlu0 4
    %105 = vperm.xlu0 %104, %v26
    %v106 = vpop.permute.xlu0 %105
    %v108 = vsel %vm68, 1, 0
    %v109 = vlaneseq
    %v110 = vshrl.u32 %v109, 7
    %v111 = vsub.s32 0, %v110
    %v112 = vrot.slane %v108, %v111
    %v113 = vlaneseq
    %v114 = vshrl.u32 %v113, 7
    %v115 = vsub.s32 1, %v114
    %v116 = vrot.slane %v108, %v115
    %vm117 = vcmp.eq.s32.totalorder %v112, 1
    %vm118 = vcmp.eq.s32.totalorder %v116, 1
    %119 = vset.pattern.permute.xlu0 5
    %120 = vperm.xlu0 %119, %v26
    %v121 = vpop.permute.xlu0 %120
    %v123 = vsel %vm117, %v121, 0.0
    %v124 = vsel %vm118, %v121, 0.0
    %vm125 = vcmp.lt.s32.totalorder %v27, 15
    %vm126 = vmand %vm125, %vm31
    %v127 = vsel %vm126, 1, 0
    %v128 = vlaneseq
    %v129 = vshrl.u32 %v128, 7
    %v130 = vsub.s32 0, %v129
    %v131 = vrot.slane %v127, %v130
    %v132 = vlaneseq
    %v133 = vshrl.u32 %v132, 7
    %v134 = vsub.s32 1, %v133
    %v135 = vrot.slane %v127, %v134
    %vm136 = vcmp.eq.s32.totalorder %v131, 1
    %vm137 = vcmp.eq.s32.totalorder %v135, 1
    %138 = vset.pattern.permute.xlu0 6
    %139 = vperm.xlu0 %138, %v26
    %v140 = vpop.permute.xlu0 %139
    %v142 = vsel %vm136, %v140, 0.0
    %v143 = vsel %vm137, %v140, 0.0
    %v144 = vsel %vm125, 1, 0
    %v145 = vlaneseq
    %v146 = vshrl.u32 %v145, 7
    %v147 = vsub.s32 0, %v146
    %v148 = vrot.slane %v144, %v147
    %v149 = vlaneseq
    %v150 = vshrl.u32 %v149, 7
    %v151 = vsub.s32 1, %v150
    %v152 = vrot.slane %v144, %v151
    %vm153 = vcmp.eq.s32.totalorder %v148, 1
    %vm154 = vcmp.eq.s32.totalorder %v152, 1
    %155 = vset.pattern.permute.xlu0 7
    %156 = vperm.xlu0 %155, %v26
    %v157 = vpop.permute.xlu0 %156
    %v159 = vsel %vm153, %v157, 0.0
    %v160 = vsel %vm154, %v157, 0.0
    %vm161 = vmand %vm125, %vm68
    %v162 = vsel %vm161, 1, 0
    %v163 = vlaneseq
    %v164 = vshrl.u32 %v163, 7
    %v165 = vsub.s32 0, %v164
    %v166 = vrot.slane %v162, %v165
    %v167 = vlaneseq
    %v168 = vshrl.u32 %v167, 7
    %v169 = vsub.s32 1, %v168
    %v170 = vrot.slane %v162, %v169
    %vm171 = vcmp.eq.s32.totalorder %v166, 1
    %vm172 = vcmp.eq.s32.totalorder %v170, 1
    %173 = vset.pattern.permute.xlu0 8
    %174 = vperm.xlu0 %173, %v26
    %v175 = vpop.permute.xlu0 %174
    %v177 = vsel %vm171, %v175, 0.0
    %v178 = vsel %vm172, %v175, 0.0
    %v179 = vld [vmem:[%s4] sm:$0xff]
    %181 = vset.pattern.permute.xlu0 0
    %182 = vperm.xlu0 %181, %v179
    %v183 = vpop.permute.xlu0 %182
    %v185 = vld [vmem:[%s0] sm:$0xff]
    %187 = vset.pattern.permute.xlu0 0
    %188 = vperm.xlu0 %187, %v25
    %v189 = vpop.permute.xlu0 %188
    %v192 = vcombine.high %v185, %v185
    %vm193 = vcmask 31744
    %v195 = vsel %vm193, %v24, 0
    %vm197 = vcmask 1043456
    %v198 = vsel %vm197, %v185, 0
    %v200 = vsel %vm197, %v192, 0
    %202 = vmatprep.subr.mxu0 %v200
    %203 = vmatpush1.msra.mxu0 %v198
    %204 = vmatprep.subr.mxu0 0.0
    %205 = vmatpush1.msra.mxu0 0.0
    %206 = vmatprep.subr.mxu0 0.0
    %207 = vmatpush1.msra.mxu0 0.0
    %208 = vmatprep.subr.mxu0 0.0
    %209 = vmatpush1.msra.mxu0 0.0
    %210 = vmatprep.subr.mxu0 0.0
    %211 = vmatpush1.msra.mxu0 0.0
    %212 = vmatprep.subr.mxu0 0.0
    %213 = vmatpush1.msra.mxu0 0.0
    %214 = vmatprep.subr.mxu0 0.0
    %215 = vmatpush1.msra.mxu0 0.0
    %216 = vmatprep.subr.mxu0 0.0
    %217 = vmatpush1.msra.mxu0 0.0
    %218 = vmatprep.subr.mxu0 0.0
    %219 = vmatpush1.msra.mxu0 0.0
    %220 = vmatprep.subr.mxu0 0.0
    %221 = vmatpush1.msra.mxu0 0.0
    %222 = vmatprep.subr.mxu0 0.0
    %223 = vmatpush1.msra.mxu0 0.0
    %224 = vmatprep.subr.mxu0 0.0
    %225 = vmatpush1.msra.mxu0 0.0
    %226 = vmatprep.subr.mxu0 0.0
    %227 = vmatpush1.msra.mxu0 0.0
    %228 = vmatprep.subr.mxu0 0.0
    %229 = vmatpush1.msra.mxu0 0.0
    %230 = vmatprep.subr.mxu0 0.0
    %231 = vmatpush1.msra.mxu0 0.0
    %232 = vmatprep.subr.mxu0 0.0
    %233 = vmatpush1.msra.mxu0 0.0
    %234 = vmatprep.subr.mxu0 0.0
    %235 = vmatpush1.msra.mxu0 0.0
    %236 = vmatprep.subr.mxu0 0.0
    %237 = vmatpush1.msra.mxu0 0.0
    %238 = vmatprep.subr.mxu0 0.0
    %239 = vmatpush1.msra.mxu0 0.0
    %240 = vmatprep.subr.mxu0 0.0
    %241 = vmatpush1.msra.mxu0 0.0
    %242 = vmatprep.subr.mxu0 0.0
    %243 = vmatpush1.msra.mxu0 0.0
    %244 = vmatprep.subr.mxu0 0.0
    %245 = vmatpush1.msra.mxu0 0.0
    %246 = vmatprep.subr.mxu0 0.0
    %247 = vmatpush1.msra.mxu0 0.0
    %248 = vmatprep.subr.mxu0 0.0
    %249 = vmatpush1.msra.mxu0 0.0
    %250 = vmatprep.subr.mxu0 0.0
    %251 = vmatpush1.msra.mxu0 0.0
    %252 = vmatprep.subr.mxu0 0.0
    %253 = vmatpush1.msra.mxu0 0.0
    %254 = vmatprep.subr.mxu0 0.0
    %255 = vmatpush1.msra.mxu0 0.0
    %256 = vmatprep.subr.mxu0 0.0
    %257 = vmatpush1.msra.mxu0 0.0
    %258 = vmatprep.subr.mxu0 0.0
    %259 = vmatpush1.msra.mxu0 0.0
    %260 = vmatprep.subr.mxu0 0.0
    %261 = vmatpush1.msra.mxu0 0.0
    %262 = vmatprep.subr.mxu0 0.0
    %263 = vmatpush1.msra.mxu0 0.0
    %264 = vmatprep.subr.mxu0 0.0
    %265 = vmatpush1.msra.mxu0 0.0
    %266 = vmatprep.mubr.f32.mxu0 0.0
    %267 = vmatmul.mubr.f32.gmra.mrb[0].mxu0 %v195
    %v268 = vpop.f32.mrb[0].mxu0
    %v269 = vadd.f32 %v189, %v268
    %v270 = vpop.f32.mrb[0].mxu0
    %v271 = vadd.f32 %v189, %v270
    %272 = vdwg.mxu0
    %273 = vrot.lane.b32.xlu0 %v269, 17
    %v274 = vpop.permute.xlu0 %273
    %275 = vrot.lane.b32.xlu0 %v271, 17
    %v276 = vpop.permute.xlu0 %275
    %v277 = vlaneseq
    %v278 = vand.u32 %v277, 127
    %vm279 = vcmp.lt.s32.totalorder %v278, 17
    %v280 = vsel %vm279, %v274, %v276
    %v281 = vsel %vm279, %v276, %v274
    %v282 = vmul.f32 %v281, %v49
    %v283 = vmul.f32 %v280, %v50
    %v284 = vadd.f32 %v183, %v282
    %v285 = vadd.f32 %v183, %v283
    %286 = vrot.lane.b32.xlu0 %v269, 16
    %v287 = vpop.permute.xlu0 %286
    %288 = vrot.lane.b32.xlu0 %v271, 16
    %v289 = vpop.permute.xlu0 %288
    %vm290 = vcmp.lt.s32.totalorder %v278, 16
    %v291 = vsel %vm290, %v287, %v289
    %v292 = vsel %vm290, %v289, %v287
    %v293 = vmul.f32 %v292, %v66
    %v294 = vmul.f32 %v291, %v67
    %v295 = vadd.f32 %v284, %v293
    %v296 = vadd.f32 %v285, %v294
    %297 = vrot.lane.b32.xlu0 %v269, 15
    %v298 = vpop.permute.xlu0 %297
    %299 = vrot.lane.b32.xlu0 %v271, 15
    %v300 = vpop.permute.xlu0 %299
    %vm301 = vcmp.lt.s32.totalorder %v278, 15
    %v302 = vsel %vm301, %v298, %v300
    %v303 = vsel %vm301, %v300, %v298
    %v304 = vmul.f32 %v303, %v85
    %v305 = vmul.f32 %v302, %v86
    %v306 = vadd.f32 %v295, %v304
    %v307 = vadd.f32 %v296, %v305
    %308 = vrot.lane.b32.xlu0 %v269, 1
    %v309 = vpop.permute.xlu0 %308
    %310 = vrot.lane.b32.xlu0 %v271, 1
    %v311 = vpop.permute.xlu0 %310
    %vm312 = vcmp.lt.s32.totalorder %v278, 1
    %v313 = vsel %vm312, %v309, %v311
    %v314 = vsel %vm312, %v311, %v309
    %v315 = vmul.f32 %v314, %v102
    %v316 = vmul.f32 %v313, %v103
    %v317 = vadd.f32 %v306, %v315
    %v318 = vadd.f32 %v307, %v316
    %v319 = vmul.f32 %v269, %v106
    %v320 = vmul.f32 %v271, %v106
    %v321 = vadd.f32 %v317, %v319
    %v322 = vadd.f32 %v318, %v320
    %323 = vrot.lane.b32.xlu0 %v269, 127
    %v324 = vpop.permute.xlu0 %323
    %325 = vrot.lane.b32.xlu0 %v271, 127
    %v326 = vpop.permute.xlu0 %325
    %vm327 = vcmp.lt.s32.totalorder %v278, 127
    %v328 = vsel %vm327, %v324, %v326
    %v329 = vsel %vm327, %v326, %v324
    %v330 = vmul.f32 %v328, %v123
    %v331 = vmul.f32 %v329, %v124
    %v332 = vadd.f32 %v321, %v330
    %v333 = vadd.f32 %v322, %v331
    %334 = vrot.lane.b32.xlu0 %v269, 113
    %v335 = vpop.permute.xlu0 %334
    %336 = vrot.lane.b32.xlu0 %v271, 113
    %v337 = vpop.permute.xlu0 %336
    %vm338 = vcmp.lt.s32.totalorder %v278, 113
    %v339 = vsel %vm338, %v335, %v337
    %v340 = vsel %vm338, %v337, %v335
    %v341 = vmul.f32 %v339, %v142
    %v342 = vmul.f32 %v340, %v143
    %v343 = vadd.f32 %v332, %v341
    %v344 = vadd.f32 %v333, %v342
    %345 = vrot.lane.b32.xlu0 %v269, 112
    %v346 = vpop.permute.xlu0 %345
    %347 = vrot.lane.b32.xlu0 %v271, 112
    %v348 = vpop.permute.xlu0 %347
    %vm349 = vcmp.lt.s32.totalorder %v278, 112
    %v350 = vsel %vm349, %v346, %v348
    %v351 = vsel %vm349, %v348, %v346
    %v352 = vmul.f32 %v350, %v159
    %v353 = vmul.f32 %v351, %v160
    %v354 = vadd.f32 %v343, %v352
    %v355 = vadd.f32 %v344, %v353
    %356 = vrot.lane.b32.xlu0 %v269, 111
    %v357 = vpop.permute.xlu0 %356
    %358 = vrot.lane.b32.xlu0 %v271, 111
    %v359 = vpop.permute.xlu0 %358
    %vm360 = vcmp.lt.s32.totalorder %v278, 111
    %v361 = vsel %vm360, %v357, %v359
    %v362 = vsel %vm360, %v359, %v357
    %v363 = vmul.f32 %v361, %v177
    %v364 = vmul.f32 %v362, %v178
    %v365 = vadd.f32 %v354, %v363
    %v366 = vadd.f32 %v355, %v364
    %vm367 = vcmp.gt.f32.partialorder %v365, 0.0
    %vm368 = vcmp.gt.f32.partialorder %v366, 0.0
    %v369 = vmul.f32 %v365, 1.442695
    %v370 = vpow.pop %v369
    %v371 = vmul.f32 %v366, 1.442695
    %v372 = vpow.pop %v371
    %v373 = vsub.f32 %v370, 1.0
    %v374 = vsub.f32 %v372, 1.0
    %v375 = vsel %vm367, %v365, %v373
    %v376 = vsel %vm368, %v366, %v374
    %377 = vst [vmem:[#allocation2] sm:$0xff] %v375
    %378 = vst [vmem:[#allocation2 + $0x8] sm:$0xff] %v376
    %s379 = scalar_lea.vmem %s0, 8
    %v380 = vld [vmem:[%s379] sm:$0xff]
    %v382 = vcombine.high %v380, %v380
    %v383 = vsel %vm197, %v380, 0
    %v385 = vsel %vm197, %v382, 0
    %387 = vmatprep.subr.mxu0 %v385
    %388 = vmatpush1.msra.mxu0 %v383
    %389 = vmatprep.subr.mxu0 0.0
    %390 = vmatpush1.msra.mxu0 0.0
    %391 = vmatprep.subr.mxu0 0.0
    %392 = vmatpush1.msra.mxu0 0.0
    %393 = vmatprep.subr.mxu0 0.0
    %394 = vmatpush1.msra.mxu0 0.0
    %395 = vmatprep.subr.mxu0 0.0
    %396 = vmatpush1.msra.mxu0 0.0
    %397 = vmatprep.subr.mxu0 0.0
    %398 = vmatpush1.msra.mxu0 0.0
    %399 = vmatprep.subr.mxu0 0.0
    %400 = vmatpush1.msra.mxu0 0.0
    %401 = vmatprep.subr.mxu0 0.0
    %402 = vmatpush1.msra.mxu0 0.0
    %403 = vmatprep.subr.mxu0 0.0
    %404 = vmatpush1.msra.mxu0 0.0
    %405 = vmatprep.subr.mxu0 0.0
    %406 = vmatpush1.msra.mxu0 0.0
    %407 = vmatprep.subr.mxu0 0.0
    %408 = vmatpush1.msra.mxu0 0.0
    %409 = vmatprep.subr.mxu0 0.0
    %410 = vmatpush1.msra.mxu0 0.0
    %411 = vmatprep.subr.mxu0 0.0
    %412 = vmatpush1.msra.mxu0 0.0
    %413 = vmatprep.subr.mxu0 0.0
    %414 = vmatpush1.msra.mxu0 0.0
    %415 = vmatprep.subr.mxu0 0.0
    %416 = vmatpush1.msra.mxu0 0.0
    %417 = vmatprep.subr.mxu0 0.0
    %418 = vmatpush1.msra.mxu0 0.0
    %419 = vmatprep.subr.mxu0 0.0
    %420 = vmatpush1.msra.mxu0 0.0
    %421 = vmatprep.subr.mxu0 0.0
    %422 = vmatpush1.msra.mxu0 0.0
    %423 = vmatprep.subr.mxu0 0.0
    %424 = vmatpush1.msra.mxu0 0.0
    %425 = vmatprep.subr.mxu0 0.0
    %426 = vmatpush1.msra.mxu0 0.0
    %427 = vmatprep.subr.mxu0 0.0
    %428 = vmatpush1.msra.mxu0 0.0
    %429 = vmatprep.subr.mxu0 0.0
    %430 = vmatpush1.msra.mxu0 0.0
    %431 = vmatprep.subr.mxu0 0.0
    %432 = vmatpush1.msra.mxu0 0.0
    %433 = vmatprep.subr.mxu0 0.0
    %434 = vmatpush1.msra.mxu0 0.0
    %435 = vmatprep.subr.mxu0 0.0
    %436 = vmatpush1.msra.mxu0 0.0
    %437 = vmatprep.subr.mxu0 0.0
    %438 = vmatpush1.msra.mxu0 0.0
    %439 = vmatprep.subr.mxu0 0.0
    %440 = vmatpush1.msra.mxu0 0.0
    %441 = vmatprep.subr.mxu0 0.0
    %442 = vmatpush1.msra.mxu0 0.0
    %443 = vmatprep.subr.mxu0 0.0
    %444 = vmatpush1.msra.mxu0 0.0
    %445 = vmatprep.subr.mxu0 0.0
    %446 = vmatpush1.msra.mxu0 0.0
    %447 = vmatprep.subr.mxu0 0.0
    %448 = vmatpush1.msra.mxu0 0.0
    %449 = vmatprep.subr.mxu0 0.0
    %450 = vmatpush1.msra.mxu0 0.0
    %451 = vmatprep.mubr.f32.mxu0 0.0
    %452 = vmatmul.mubr.f32.gmra.mrb[0].mxu0 %v195
    %v453 = vpop.f32.mrb[0].mxu0
    %v454 = vadd.f32 %v189, %v453
    %v455 = vpop.f32.mrb[0].mxu0
    %v456 = vadd.f32 %v189, %v455
    %457 = vdwg.mxu0
    %458 = vrot.lane.b32.xlu0 %v454, 17
    %v459 = vpop.permute.xlu0 %458
    %460 = vrot.lane.b32.xlu0 %v456, 17
    %v461 = vpop.permute.xlu0 %460
    %v462 = vsel %vm279, %v459, %v461
    %v463 = vsel %vm279, %v461, %v459
    %v464 = vmul.f32 %v463, %v49
    %v465 = vmul.f32 %v462, %v50
    %v466 = vadd.f32 %v183, %v464
    %v467 = vadd.f32 %v183, %v465
    %468 = vrot.lane.b32.xlu0 %v454, 16
    %v469 = vpop.permute.xlu0 %468
    %470 = vrot.lane.b32.xlu0 %v456, 16
    %v471 = vpop.permute.xlu0 %470
    %v472 = vsel %vm290, %v469, %v471
    %v473 = vsel %vm290, %v471, %v469
    %v474 = vmul.f32 %v473, %v66
    %v475 = vmul.f32 %v472, %v67
    %v476 = vadd.f32 %v466, %v474
    %v477 = vadd.f32 %v467, %v475
    %478 = vrot.lane.b32.xlu0 %v454, 15
    %v479 = vpop.permute.xlu0 %478
    %480 = vrot.lane.b32.xlu0 %v456, 15
    %v481 = vpop.permute.xlu0 %480
    %v482 = vsel %vm301, %v479, %v481
    %v483 = vsel %vm301, %v481, %v479
    %v484 = vmul.f32 %v483, %v85
    %v485 = vmul.f32 %v482, %v86
    %v486 = vadd.f32 %v476, %v484
    %v487 = vadd.f32 %v477, %v485
    %488 = vrot.lane.b32.xlu0 %v454, 1
    %v489 = vpop.permute.xlu0 %488
    %490 = vrot.lane.b32.xlu0 %v456, 1
    %v491 = vpop.permute.xlu0 %490
    %v492 = vsel %vm312, %v489, %v491
    %v493 = vsel %vm312, %v491, %v489
    %v494 = vmul.f32 %v493, %v102
    %v495 = vmul.f32 %v492, %v103
    %v496 = vadd.f32 %v486, %v494
    %v497 = vadd.f32 %v487, %v495
    %v498 = vmul.f32 %v454, %v106
    %v499 = vmul.f32 %v456, %v106
    %v500 = vadd.f32 %v496, %v498
    %v501 = vadd.f32 %v497, %v499
    %502 = vrot.lane.b32.xlu0 %v454, 127
    %v503 = vpop.permute.xlu0 %502
    %504 = vrot.lane.b32.xlu0 %v456, 127
    %v505 = vpop.permute.xlu0 %504
    %v506 = vsel %vm327, %v503, %v505
    %v507 = vsel %vm327, %v505, %v503
    %v508 = vmul.f32 %v506, %v123
    %v509 = vmul.f32 %v507, %v124
    %v510 = vadd.f32 %v500, %v508
    %v511 = vadd.f32 %v501, %v509
    %512 = vrot.lane.b32.xlu0 %v454, 113
    %v513 = vpop.permute.xlu0 %512
    %514 = vrot.lane.b32.xlu0 %v456, 113
    %v515 = vpop.permute.xlu0 %514
    %v516 = vsel %vm338, %v513, %v515
    %v517 = vsel %vm338, %v515, %v513
    %v518 = vmul.f32 %v516, %v142
    %v519 = vmul.f32 %v517, %v143
    %v520 = vadd.f32 %v510, %v518
    %v521 = vadd.f32 %v511, %v519
    %522 = vrot.lane.b32.xlu0 %v454, 112
    %v523 = vpop.permute.xlu0 %522
    %524 = vrot.lane.b32.xlu0 %v456, 112
    %v525 = vpop.permute.xlu0 %524
    %v526 = vsel %vm349, %v523, %v525
    %v527 = vsel %vm349, %v525, %v523
    %v528 = vmul.f32 %v526, %v159
    %v529 = vmul.f32 %v527, %v160
    %v530 = vadd.f32 %v520, %v528
    %v531 = vadd.f32 %v521, %v529
    %532 = vrot.lane.b32.xlu0 %v454, 111
    %v533 = vpop.permute.xlu0 %532
    %534 = vrot.lane.b32.xlu0 %v456, 111
    %v535 = vpop.permute.xlu0 %534
    %v536 = vsel %vm360, %v533, %v535
    %v537 = vsel %vm360, %v535, %v533
    %v538 = vmul.f32 %v536, %v177
    %v539 = vmul.f32 %v537, %v178
    %v540 = vadd.f32 %v530, %v538
    %v541 = vadd.f32 %v531, %v539
    %vm542 = vcmp.gt.f32.partialorder %v540, 0.0
    %vm543 = vcmp.gt.f32.partialorder %v541, 0.0
    %v544 = vmul.f32 %v540, 1.442695
    %v545 = vpow.pop %v544
    %v546 = vmul.f32 %v541, 1.442695
    %v547 = vpow.pop %v546
    %v548 = vsub.f32 %v545, 1.0
    %v549 = vsub.f32 %v547, 1.0
    %v550 = vsel %vm542, %v540, %v548
    %v551 = vsel %vm543, %v541, %v549
    %s552 = scalar_lea.vmem [#allocation2], 16
    %553 = vst [vmem:[%s552] sm:$0xff] %v550
    %554 = vst [vmem:[%s552 + $0x8] sm:$0xff] %v551
    // Predicated region
    $region26: #{tpu_custom_call.1} parent=1 // pred_check
      _
    $region27: #{tpu_custom_call.1} parent=1 // pred_check_branch
      %556 = sbr.rel (0) target = $region29
    $region28: #{tpu_custom_call.1} parent=1 // pred_region
      %s558 = ssub.s32 512, 512
      %559 = vsyncadd [#allocation3], %s558
      %s560 = sshll.u32 [#allocation2], 4
      %s561 = int_to_ptr.vmem [resolvable:$true] %s560
      %566 = dma.vmem_to_hbm [thread:$0]  %s561, 512, %s6, [#allocation3], 256, 256, 16
    $region29: #{tpu_custom_call.1} parent=1 // pred_fallthru
      _
    // Predicated region
    $region30: #{tpu_custom_call.1} parent=1 // pred_check
      _
    $region31: #{tpu_custom_call.1} parent=1 // pred_check_branch
      %568 = sbr.rel (0) target = $region33
    $region32: #{tpu_custom_call.1} parent=1 // pred_region
      %569 = dma.done [#allocation3], 512
    $region33: #{tpu_custom_call.1} parent=1 // pred_fallthru
      _
    %570 = vsyncpa [#allocation3], 1

</llo_original>
